<compile_context>
chip_gen: v6e
topology: v6e:2x2x1
jax: 0.10.0
libtpu: 0.0.40
codegen_flags: <defaults>
</compile_context>

<pallas_src>
import jax
import jax.numpy as jnp
from jax.experimental import pallas as pl
from jax.experimental.pallas import tpu as pltpu


def _round_up(x, m):
    return ((x + m - 1) // m) * m


def _pick_block_mid(mid_p, in_p, out_p, itemsize, max_block_mid, weight_budget):
    """Largest multiple of 128 dividing mid_p, capped by max_block_mid and by a
    VMEM budget for the (double-buffered) W1/W2 slabs."""
    cap = min(mid_p, max(128, _round_up(max_block_mid, 128)))
    per_col = 2 * (in_p + out_p) * itemsize          # 2 pipeline buffers
    cap = min(cap, max(128, (weight_budget // max(per_col, 1)) // 128 * 128))
    b = cap
    while mid_p % b:
        b -= 128
    return b


def prepare_mlp_params(w1, b1, w2, b2, *, compute_dtype=jnp.bfloat16,
                       max_block_mid=512, weight_vmem_budget=16 << 20):
    """Pad weights to lane-dense multiples of 128 and cast them ONCE.

    w1: [in_dim, mid], w2: [mid, out_dim] (i.e. transposed from PyTorch's
    nn.Linear [out, in] layout).  Zero padding is exact for Linear+LeakyReLU:
    padded input cols hit zero weight rows; padded mid cols get zero
    weight+bias -> LeakyReLU(0)=0 -> zero contribution through zero W2 rows;
    padded output cols are sliced off after the kernel.
    """
    in_dim, mid = w1.shape
    mid_w2, out_dim = w2.shape
    assert mid_w2 == mid and b1.shape == (mid,) and b2.shape == (out_dim,)

    in_p = _round_up(in_dim, 128)
    mid_p = _round_up(mid, 128)
    out_p = _round_up(out_dim, 128)
    itemsize = jnp.dtype(compute_dtype).itemsize
    block_mid = _pick_block_mid(mid_p, in_p, out_p, itemsize,
                                max_block_mid, weight_vmem_budget)

    w1_p = jnp.pad(w1, ((0, in_p - in_dim), (0, mid_p - mid))).astype(compute_dtype)
    b1_p = jnp.pad(b1, (0, mid_p - mid)).reshape(1, mid_p).astype(jnp.float32)
    w2_p = jnp.pad(w2, ((0, mid_p - mid), (0, out_p - out_dim))).astype(compute_dtype)
    b2_p = jnp.pad(b2, (0, out_p - out_dim)).reshape(1, out_p).astype(jnp.float32)

    return dict(w1=w1_p, b1=b1_p, w2=w2_p, b2=b2_p,
                in_dim=in_dim, mid=mid, out_dim=out_dim,
                in_p=in_p, mid_p=mid_p, out_p=out_p,
                block_mid=block_mid, compute_dtype=compute_dtype)


def mlp_kernel(x_ref, w1_ref, b1_ref, w2_ref, b2_ref, o_ref, acc_ref):
    j = pl.program_id(1)

    @pl.when(j == 0)
    def _init():
        acc_ref[...] = jnp.zeros_like(acc_ref)

    # fc1 slice: (block_b, block_mid), bf16 operands, f32 accumulation (MXU).
    h = jnp.dot(x_ref[...], w1_ref[...], preferred_element_type=jnp.float32)
    h = h + b1_ref[...]
    # LeakyReLU(0.1) == max(h, 0.1*h) for slope in (0, 1).
    h = jnp.maximum(h, 0.1 * h)
    # fc2 partial product, accumulated into the resident f32 scratch.
    acc_ref[...] += jnp.dot(h.astype(w2_ref.dtype), w2_ref[...],
                            preferred_element_type=jnp.float32)

    @pl.when(j == pl.num_programs(1) - 1)
    def _finalize():
        o_ref[...] = (acc_ref[...] + b2_ref[...]).astype(o_ref.dtype)


def mlp_pallas(x, params, *, max_block_b=256):
    """Apply the fused MLP to x[..., in_dim] using pre-padded/cast params."""
    in_dim = params["in_dim"]
    out_dim = params["out_dim"]
    in_p, mid_p, out_p = params["in_p"], params["mid_p"], params["out_p"]
    block_mid = params["block_mid"]
    cd = params["compute_dtype"]
    assert x.shape[-1] == in_dim

    lead_shape = x.shape[:-1]
    x2 = x.reshape(-1, in_dim)
    B = x2.shape[0]

    itemsize = jnp.dtype(cd).itemsize
    sublane = {4: 8, 2: 16, 1: 32}[itemsize]
    # Target >= 2 batch steps when B allows it, so the "parallel" axis can be
    # sharded across both v7x TensorCores; tiles stay sublane-aligned.
    block_b = min(max_block_b, max(_round_up(-(-B // 2), sublane), sublane))
    Bp = _round_up(max(B, 1), block_b)
    grid_b = Bp // block_b
    mid_steps = mid_p // block_mid

    # Cast to the compute dtype first (halves the bytes we then pad); the
    # zero padding is exact for Linear + LeakyReLU (rows are independent).
    xc = x2 if x2.dtype == cd else x2.astype(cd)
    if Bp != B or in_p != in_dim:
        xc = jnp.pad(xc, ((0, Bp - B), (0, in_p - in_dim)))

    out_dtype = x.dtype
    out_itemsize = jnp.dtype(out_dtype).itemsize

    flops = 2 * Bp * mid_p * (in_p + out_p)
    weight_reads = grid_b if mid_steps > 1 else 1
    bytes_accessed = (Bp * in_p * itemsize
                      + weight_reads * (in_p * mid_p + mid_p * out_p) * itemsize
                      + (mid_p + out_p) * 4
                      + Bp * out_p * out_itemsize)

    # VMEM footprint: double-buffered x/out/W tiles, biases, f32 accumulator.
    vmem_bytes = (2 * block_b * in_p * itemsize
                  + 2 * (in_p + out_p) * block_mid * itemsize
                  + 2 * (block_mid + out_p) * 4
                  + 2 * block_b * out_p * out_itemsize
                  + block_b * out_p * 4)
    vmem_limit = min(max(2 * vmem_bytes, 16 << 20) + (2 << 20), 64 << 20)

    out_padded = pl.pallas_call(
        mlp_kernel,
        out_shape=jax.ShapeDtypeStruct((Bp, out_p), out_dtype),
        grid_spec=pltpu.PrefetchScalarGridSpec(
            num_scalar_prefetch=0,
            grid=(grid_b, mid_steps),
            in_specs=[
                pl.BlockSpec((block_b, in_p), lambda i, j: (i, 0)),     # x tile
                pl.BlockSpec((in_p, block_mid), lambda i, j: (0, j)),   # W1 cols
                pl.BlockSpec((1, block_mid), lambda i, j: (0, j)),      # b1 slice
                pl.BlockSpec((block_mid, out_p), lambda i, j: (j, 0)),  # W2 rows
                pl.BlockSpec((1, out_p), lambda i, j: (0, 0)),          # b2
            ],
            out_specs=pl.BlockSpec((block_b, out_p), lambda i, j: (i, 0)),
            scratch_shapes=[pltpu.VMEM((block_b, out_p), jnp.float32)],
        ),
        compiler_params=pltpu.CompilerParams(
            dimension_semantics=("parallel", "arbitrary"),
            vmem_limit_bytes=int(vmem_limit)),
        cost_estimate=pl.CostEstimate(
            flops=int(flops), transcendentals=0,
            bytes_accessed=int(bytes_accessed)),
    )(xc, params["w1"], params["b1"], params["w2"], params["b2"])

    out = out_padded[:B, :out_dim]
    return out.reshape(lead_shape + (out_dim,))


def mlp_reference_f32(x, w1, b1, w2, b2):
    h = x @ w1 + b1
    h = jnp.where(h > 0, h, 0.1 * h)
    return h @ w2 + b2


def mlp_reference_matched(x, w1, b1, w2, b2, compute_dtype):
    # Mirrors the kernel's dtype strategy (bf16 operands, f32 accumulation).
    h = jnp.dot(x.astype(compute_dtype), w1.astype(compute_dtype),
                preferred_element_type=jnp.float32) + b1
    h = jnp.maximum(h, 0.1 * h)
    out = jnp.dot(h.astype(compute_dtype), w2.astype(compute_dtype),
                  preferred_element_type=jnp.float32) + b2
    return out.astype(x.dtype)


if __name__ == "__main__":
    key = jax.random.PRNGKey(0)
    kx, kw1, kb1, kw2, kb2, kx2, kw3, kb3, kw4, kb4 = jax.random.split(key, 10)

    # --- Test 1: resident-weight path (single mid step), aligned batch. ---
    B, in_dim, mid_dim, out_dim = 16, 32, 64, 32
    x = jax.random.normal(kx, (B, in_dim), dtype=jnp.float32)
    # PyTorch stores fc.weight as [out, in]; the kernel uses [in, out].
    w1 = jax.random.normal(kw1, (in_dim, mid_dim), dtype=jnp.float32) * 0.1
    b1 = jax.random.normal(kb1, (mid_dim,), dtype=jnp.float32) * 0.1
    w2 = jax.random.normal(kw2, (mid_dim, out_dim), dtype=jnp.float32) * 0.1
    b2 = jax.random.normal(kb2, (out_dim,), dtype=jnp.float32) * 0.1

    params = prepare_mlp_params(w1, b1, w2, b2)      # one-time pad + bf16 cast
    out = jax.block_until_ready(mlp_pallas(x, params))
    assert out.shape == (B, out_dim)
    ref_m = mlp_reference_matched(x, w1, b1, w2, b2, params["compute_dtype"])
    ref_f = mlp_reference_f32(x, w1, b1, w2, b2)
    assert jnp.allclose(out, ref_m, atol=2e-3, rtol=2e-3), "mismatch (bf16-matched ref)"
    assert jnp.allclose(out, ref_f, atol=6e-2, rtol=6e-2), "mismatch (f32 ref)"

    # --- Test 2: ragged batch (exercises the alignment-pad path). ---
    x_odd = x[:13]
    out_odd = jax.block_until_ready(mlp_pallas(x_odd, params))
    assert out_odd.shape == (13, out_dim)
    ref_odd = mlp_reference_matched(x_odd, w1, b1, w2, b2, params["compute_dtype"])
    assert jnp.allclose(out_odd, ref_odd, atol=2e-3, rtol=2e-3), "odd-batch mismatch"

    # --- Test 3: streamed-mid path (2 mid steps) + multi-step batch grid. ---
    B2, mid2 = 48, 256
    x_b = jax.random.normal(kx2, (B2, in_dim), dtype=jnp.float32)
    w1b = jax.random.normal(kw3, (in_dim, mid2), dtype=jnp.float32) * 0.1
    b1b = jax.random.normal(kb3, (mid2,), dtype=jnp.float32) * 0.1
    w2b = jax.random.normal(kw4, (mid2, out_dim), dtype=jnp.float32) * 0.1
    b2b = jax.random.normal(kb4, (out_dim,), dtype=jnp.float32) * 0.1
    params_b = prepare_mlp_params(w1b, b1b, w2b, b2b, max_block_mid=128)
    out_b = jax.block_until_ready(mlp_pallas(x_b, params_b, max_block_b=32))
    assert out_b.shape == (B2, out_dim)
    ref_b = mlp_reference_matched(x_b, w1b, b1b, w2b, b2b, params_b["compute_dtype"])
    assert jnp.allclose(out_b, ref_b, atol=2e-3, rtol=2e-3), "streamed-mid mismatch"

    print("KERNEL_OK")
</pallas_src>

<mosaic_0001>
module attributes {stable_mosaic.version = 11 : i64} {
  func.func @mlp_kernel(%arg0: i32, %arg1: i32, %arg2: memref<16x128xbf16, #tpu.memory_space<vmem>>, %arg3: memref<128x128xbf16, #tpu.memory_space<vmem>>, %arg4: memref<1x128xf32, #tpu.memory_space<vmem>>, %arg5: memref<128x128xbf16, #tpu.memory_space<vmem>>, %arg6: memref<1x128xf32, #tpu.memory_space<vmem>>, %arg7: memref<16x128xf32, #tpu.memory_space<vmem>>, %arg8: memref<16x128xf32, #tpu.memory_space<vmem>>) attributes {dimension_semantics = [#tpu.dimension_semantics<parallel>, #tpu.dimension_semantics<arbitrary>], iteration_bounds = array<i64: 1, 1>, scalar_prefetch = 0 : i64, scratch_operands = 1 : i64, tpu.core_type = #tpu.core_type<tc>, window_params = [{transform_indices = @transform_0, window_bounds = array<i64: 16, 128>}, {transform_indices = @transform_1, window_bounds = array<i64: 128, 128>}, {transform_indices = @transform_2, window_bounds = array<i64: 1, 128>}, {transform_indices = @transform_3, window_bounds = array<i64: 128, 128>}, {pipeline_mode = #tpu.pipeline_mode<synchronous>, transform_indices = @transform_4, window_bounds = array<i64: 1, 128>}, {transform_indices = @transform_5, window_bounds = array<i64: 16, 128>}]} {
    %c0_i32 = arith.constant 0 : i32
    %0 = arith.cmpi eq, %arg1, %c0_i32 : i32
    %1 = arith.extui %0 : i1 to i32
    %c0_i32_0 = arith.constant 0 : i32
    %2 = arith.cmpi ne, %1, %c0_i32_0 : i32
    scf.if %2 {
      %cst_16 = arith.constant 0.000000e+00 : f32
      %21 = vector.broadcast %cst_16 : f32 to vector<16x128xf32>
      %c0_17 = arith.constant 0 : index
      %c0_18 = arith.constant 0 : index
      %22 = vector.load %arg8[%c0_17, %c0_18] : memref<16x128xf32, #tpu.memory_space<vmem>>, vector<16x128xf32>
      tpu.vector_store %arg8[%c0_17, %c0_18], %21 {strides = array<i32>} : memref<16x128xf32, #tpu.memory_space<vmem>>, vector<16x128xf32>,
    } else {
    }
    %c0 = arith.constant 0 : index
    %c0_1 = arith.constant 0 : index
    %3 = vector.load %arg2[%c0, %c0_1] : memref<16x128xbf16, #tpu.memory_space<vmem>>, vector<16x128xbf16>
    %c0_2 = arith.constant 0 : index
    %c0_3 = arith.constant 0 : index
    %4 = vector.load %arg3[%c0_2, %c0_3] : memref<128x128xbf16, #tpu.memory_space<vmem>>, vector<128x128xbf16>
    %cst = arith.constant dense<0.000000e+00> : vector<16x128xf32>
    %5 = tpu.matmul %3, %4, %cst {dimension_numbers = #tpu.dot_dimension_numbers<[1], [0], [0], [1], [0, 0, 1, 1], [], []>} : vector<16x128xbf16>, vector<128x128xbf16>, vector<16x128xf32> -> vector<16x128xf32>
    %c0_4 = arith.constant 0 : index
    %c0_5 = arith.constant 0 : index
    %6 = vector.load %arg4[%c0_4, %c0_5] : memref<1x128xf32, #tpu.memory_space<vmem>>, vector<1x128xf32>
    %7 = vector.broadcast %6 : vector<1x128xf32> to vector<16x128xf32>
    %8 = arith.addf %5, %7 : vector<16x128xf32>
    %cst_6 = arith.constant 1.000000e-01 : f32
    %9 = vector.broadcast %cst_6 : f32 to vector<16x128xf32>
    %10 = arith.mulf %9, %8 : vector<16x128xf32>
    %11 = arith.maximumf %8, %10 : vector<16x128xf32>
    %c0_7 = arith.constant 0 : index
    %c0_8 = arith.constant 0 : index
    %12 = vector.load %arg8[%c0_7, %c0_8] : memref<16x128xf32, #tpu.memory_space<vmem>>, vector<16x128xf32>
    %13 = arith.truncf %11 : vector<16x128xf32> to vector<16x128xbf16>
    %c0_9 = arith.constant 0 : index
    %c0_10 = arith.constant 0 : index
    %14 = vector.load %arg5[%c0_9, %c0_10] : memref<128x128xbf16, #tpu.memory_space<vmem>>, vector<128x128xbf16>
    %cst_11 = arith.constant dense<0.000000e+00> : vector<16x128xf32>
    %15 = tpu.matmul %13, %14, %cst_11 {dimension_numbers = #tpu.dot_dimension_numbers<[1], [0], [0], [1], [0, 0, 1, 1], [], []>} : vector<16x128xbf16>, vector<128x128xbf16>, vector<16x128xf32> -> vector<16x128xf32>
    %16 = arith.addf %12, %15 : vector<16x128xf32>
    %c0_12 = arith.constant 0 : index
    %c0_13 = arith.constant 0 : index
    %17 = vector.load %arg8[%c0_12, %c0_13] : memref<16x128xf32, #tpu.memory_space<vmem>>, vector<16x128xf32>
    tpu.vector_store %arg8[%c0_12, %c0_13], %16 {strides = array<i32>} : memref<16x128xf32, #tpu.memory_space<vmem>>, vector<16x128xf32>,
    %c0_i32_14 = arith.constant 0 : i32
    %18 = arith.cmpi eq, %arg1, %c0_i32_14 : i32
    %19 = arith.extui %18 : i1 to i32
    %c0_i32_15 = arith.constant 0 : i32
    %20 = arith.cmpi ne, %19, %c0_i32_15 : i32
    scf.if %20 {
      %c0_16 = arith.constant 0 : index
      %c0_17 = arith.constant 0 : index
      %21 = vector.load %arg8[%c0_16, %c0_17] : memref<16x128xf32, #tpu.memory_space<vmem>>, vector<16x128xf32>
      %c0_18 = arith.constant 0 : index
      %c0_19 = arith.constant 0 : index
      %22 = vector.load %arg6[%c0_18, %c0_19] : memref<1x128xf32, #tpu.memory_space<vmem>>, vector<1x128xf32>
      %23 = vector.broadcast %22 : vector<1x128xf32> to vector<16x128xf32>
      %24 = arith.addf %21, %23 : vector<16x128xf32>
      %c0_20 = arith.constant 0 : index
      %c0_21 = arith.constant 0 : index
      %25 = vector.load %arg7[%c0_20, %c0_21] : memref<16x128xf32, #tpu.memory_space<vmem>>, vector<16x128xf32>
      tpu.vector_store %arg7[%c0_20, %c0_21], %24 {strides = array<i32>} : memref<16x128xf32, #tpu.memory_space<vmem>>, vector<16x128xf32>,
    } else {
    }
    return
  }
  func.func @transform_0(%arg0: i32, %arg1: i32) -> (i32, i32) {
    %c0_i32 = arith.constant 0 : i32
    %c0_i32_0 = arith.constant 0 : i32
    return %arg0, %c0_i32 : i32, i32
  }
  func.func @transform_1(%arg0: i32, %arg1: i32) -> (i32, i32) {
    %c0_i32 = arith.constant 0 : i32
    %c0_i32_0 = arith.constant 0 : i32
    return %c0_i32, %arg1 : i32, i32
  }
  func.func @transform_2(%arg0: i32, %arg1: i32) -> (i32, i32) {
    %c0_i32 = arith.constant 0 : i32
    %c0_i32_0 = arith.constant 0 : i32
    return %c0_i32, %arg1 : i32, i32
  }
  func.func @transform_3(%arg0: i32, %arg1: i32) -> (i32, i32) {
    %c0_i32 = arith.constant 0 : i32
    %c0_i32_0 = arith.constant 0 : i32
    return %arg1, %c0_i32 : i32, i32
  }
  func.func @transform_4(%arg0: i32, %arg1: i32) -> (i32, i32) {
    %c0_i32 = arith.constant 0 : i32
    %c0_i32_0 = arith.constant 0 : i32
    %c0_i32_1 = arith.constant 0 : i32
    return %c0_i32, %c0_i32_0 : i32, i32
  }
  func.func @transform_5(%arg0: i32, %arg1: i32) -> (i32, i32) {
    %c0_i32 = arith.constant 0 : i32
    %c0_i32_0 = arith.constant 0 : i32
    return %arg0, %c0_i32 : i32, i32
  }
}

</mosaic_0001>

<llo_original>
// kernel: tpu_custom_call.1
$region0: #{tpu_custom_call.1}
  #allocation0 [shape = 'u32[]', space=smem, size = 0x4, offset = 0x4, fixed_abs, tag = 'smem constant byte address 0x4 - core index']
  #allocation1 [shape = 'u32[144,128]{1,0:T(1,128)}', space=vmem, size = 0x12000, scoped, tag = 'internal scratch']
  #allocation2 [shape = 'f32[16,128]{1,0:T(8,128)}', space=vmem, size = 0x2000, scoped, tag = 'scratch operand']
  %s0 = inlined_call_operand.hbm [shape: bf16[16,128], index: 0, kind: input, shape index: {}]
  %s1 = inlined_call_operand.hbm [shape: bf16[128,128], index: 1, kind: input, shape index: {}]
  %s2 = inlined_call_operand.vmem [shape: f32[1,128], index: 2, kind: input, shape index: {}]
  %s3 = inlined_call_operand.hbm [shape: bf16[128,128], index: 3, kind: input, shape index: {}]
  %s4 = inlined_call_operand.vmem [shape: f32[1,128], index: 4, kind: input, shape index: {}]
  %s5 = inlined_call_operand.hbm [shape: f32[16,128], index: 5, kind: output, shape index: {}]
  %s6 = sld [smem:[#allocation0]]
  $region50: #{tpu_custom_call.1} parent=0
    _
  %s8 = ssub.s32 1, %s6
  %s9 = scalar_select 0, %s8, %s6
  $region1: #{tpu_custom_call.1} parent=0
    #allocation3 [shape = 'u8[4096]{0}', space=vmem, size = 0x1000, scoped, tag = 'input window, operand 0, single buffered']
    #allocation4 [shape = 's32[1]{0}', space=sflag, size = 0x4, scoped, tag = 'scoped memory for tpu_custom_call.1']
    #allocation5 [shape = 's32[1]{0}', space=sflag, size = 0x4, scoped, tag = 'scoped memory for tpu_custom_call.1']
    #allocation6 [shape = 'u8[32768]{0}', space=vmem, size = 0x8000, scoped, tag = 'input window, operand 1, single buffered']
    #allocation7 [shape = 's32[1]{0}', space=sflag, size = 0x4, scoped, tag = 'scoped memory for tpu_custom_call.1']
    #allocation8 [shape = 'u8[32768]{0}', space=vmem, size = 0x8000, scoped, tag = 'input window, operand 3, single buffered']
    #allocation9 [shape = 'u8[8192]{0}', space=vmem, size = 0x2000, scoped, tag = 'output window, operand 0, single buffered']
    %10 = vsyncpa [#allocation4], 0
    %11 = vsyncpa [#allocation7], 0
    %12 = vsyncpa [#allocation5], 0
    // Predicated region
    $region2: #{tpu_custom_call.1} parent=1 // pred_check
      _
    $region3: #{tpu_custom_call.1} parent=1 // pred_check_branch
      %14 = sbr.rel (0) target = $region5
    $region4: #{tpu_custom_call.1} parent=1 // pred_region
      %s16 = ssub.s32 128, 128
      %17 = vsyncadd [#allocation4], %s16
      %s18 = sshll.u32 [#allocation3], 4
      %s19 = int_to_ptr.vmem [resolvable:$true] %s18
      %24 = dma.hbm_to_vmem [thread:$0]  %s0, 128, %s19, [#allocation4], 64, 64, 4
    $region5: #{tpu_custom_call.1} parent=1 // pred_fallthru
      _
    // Predicated region
    $region6: #{tpu_custom_call.1} parent=1 // pred_check
      _
    $region7: #{tpu_custom_call.1} parent=1 // pred_check_branch
      %26 = sbr.rel (0) target = $region9
    $region8: #{tpu_custom_call.1} parent=1 // pred_region
      %s28 = ssub.s32 1024, 1024
      %29 = vsyncadd [#allocation7], %s28
      %s30 = sshll.u32 [#allocation6], 4
      %s31 = int_to_ptr.vmem [resolvable:$true] %s30
      %36 = dma.hbm_to_vmem [thread:$0]  %s1, 1024, %s31, [#allocation7], 64, 64, 4
    $region9: #{tpu_custom_call.1} parent=1 // pred_fallthru
      _
    // Predicated region
    $region10: #{tpu_custom_call.1} parent=1 // pred_check
      _
    $region11: #{tpu_custom_call.1} parent=1 // pred_check_branch
      %38 = sbr.rel (0) target = $region13
    $region12: #{tpu_custom_call.1} parent=1 // pred_region
      _
    $region13: #{tpu_custom_call.1} parent=1 // pred_fallthru
      _
    // Predicated region
    $region14: #{tpu_custom_call.1} parent=1 // pred_check
      _
    $region15: #{tpu_custom_call.1} parent=1 // pred_check_branch
      %40 = sbr.rel (0) target = $region17
    $region16: #{tpu_custom_call.1} parent=1 // pred_region
      %s42 = ssub.s32 1024, 1024
      %43 = vsyncadd [#allocation7], %s42
      %s44 = sshll.u32 [#allocation8], 4
      %s45 = int_to_ptr.vmem [resolvable:$true] %s44
      %50 = dma.hbm_to_vmem [thread:$0]  %s3, 1024, %s45, [#allocation7], 64, 64, 4
    $region17: #{tpu_custom_call.1} parent=1 // pred_fallthru
      _
    // Predicated region
    $region18: #{tpu_custom_call.1} parent=1 // pred_check
      _
    $region19: #{tpu_custom_call.1} parent=1 // pred_check_branch
      %52 = sbr.rel (0) target = $region21
    $region20: #{tpu_custom_call.1} parent=1 // pred_region
      _
    $region21: #{tpu_custom_call.1} parent=1 // pred_fallthru
      _
    // Predicated region
    $region22: #{tpu_custom_call.1} parent=1 // pred_check
      _
    $region23: #{tpu_custom_call.1} parent=1 // pred_check_branch
      %54 = sbr.rel (0) target = $region25
    $region24: #{tpu_custom_call.1} parent=1 // pred_region
      %55 = dma.done [#allocation4], 128
    $region25: #{tpu_custom_call.1} parent=1 // pred_fallthru
      _
    // Predicated region
    $region26: #{tpu_custom_call.1} parent=1 // pred_check
      _
    $region27: #{tpu_custom_call.1} parent=1 // pred_check_branch
      %57 = sbr.rel (0) target = $region29
    $region28: #{tpu_custom_call.1} parent=1 // pred_region
      %58 = dma.done [#allocation7], 1024
    $region29: #{tpu_custom_call.1} parent=1 // pred_fallthru
      _
    // Predicated region
    $region30: #{tpu_custom_call.1} parent=1 // pred_check
      _
    $region31: #{tpu_custom_call.1} parent=1 // pred_check_branch
      %60 = sbr.rel (0) target = $region33
    $region32: #{tpu_custom_call.1} parent=1 // pred_region
      %61 = dma.done [#allocation7], 1024
    $region33: #{tpu_custom_call.1} parent=1 // pred_fallthru
      _
    %p63 = scmp.eq.s32.totalorder 0, 0
    // Predicated region
    $region34: #{tpu_custom_call.1} parent=1 // pred_check
      %p64 = pneg %p63
    $region35: #{tpu_custom_call.1} parent=1 // pred_check_branch
      %66 = sbr.rel (%p64) target = $region37
    $region36: #{tpu_custom_call.1} parent=1 // pred_region
      %67 = vst [vmem:[#allocation2] sm:$0xff] 0.0
      %68 = vst [vmem:[#allocation2 + $0x8] sm:$0xff] 0.0
    $region37: #{tpu_custom_call.1} parent=1 // pred_fallthru
      _
    %v69 = vld [vmem:[#allocation3] sm:$0xf]
    %v70 = vld [vmem:[#allocation3 + $0x4] sm:$0xf]
    %v71 = vld [vmem:[#allocation6] sm:$0xf]
    %v72 = vld [vmem:[#allocation6 + $0x4] sm:$0xf]
    %v73 = vld [vmem:[#allocation6 + $0x8] sm:$0xf]
    %v74 = vld [vmem:[#allocation6 + $0xc] sm:$0xf]
    %v75 = vld [vmem:[#allocation6 + $0x10] sm:$0xf]
    %v76 = vld [vmem:[#allocation6 + $0x14] sm:$0xf]
    %v77 = vld [vmem:[#allocation6 + $0x18] sm:$0xf]
    %v78 = vld [vmem:[#allocation6 + $0x1c] sm:$0xf]
    %v79 = vld [vmem:[#allocation6 + $0x20] sm:$0xf]
    %v80 = vld [vmem:[#allocation6 + $0x24] sm:$0xf]
    %v81 = vld [vmem:[#allocation6 + $0x28] sm:$0xf]
    %v82 = vld [vmem:[#allocation6 + $0x2c] sm:$0xf]
    %v83 = vld [vmem:[#allocation6 + $0x30] sm:$0xf]
    %v84 = vld [vmem:[#allocation6 + $0x34] sm:$0xf]
    %v85 = vld [vmem:[#allocation6 + $0x38] sm:$0xf]
    %v86 = vld [vmem:[#allocation6 + $0x3c] sm:$0xf]
    %v87 = vld [vmem:[%s2] sm:$0x1]
    %v89 = vlaneseq
    %v90 = vshrl.u32 %v89, 7
    %v91 = vsub.s32 0, %v90
    %v92 = vrot.slane %v87, %v91
    %v96 = vunpack.c.l.b16 %v69
    %v97 = vunpack.c.l.b16 %v70
    %v98 = vpack.c.b16 %v97, %v96
    %v116 = vunpack.c.l.b16 %v71
    %v117 = vunpack.c.l.b16 %v72
    %v118 = vunpack.c.l.b16 %v73
    %v119 = vunpack.c.l.b16 %v74
    %v120 = vunpack.c.l.b16 %v75
    %v121 = vunpack.c.l.b16 %v76
    %v122 = vunpack.c.l.b16 %v77
    %v123 = vunpack.c.l.b16 %v78
    %v124 = vunpack.c.l.b16 %v79
    %v125 = vunpack.c.l.b16 %v80
    %v126 = vunpack.c.l.b16 %v81
    %v127 = vunpack.c.l.b16 %v82
    %v128 = vunpack.c.l.b16 %v83
    %v129 = vunpack.c.l.b16 %v84
    %v130 = vunpack.c.l.b16 %v85
    %v131 = vunpack.c.l.b16 %v86
    %v132 = vpack.c.b16 %v117, %v116
    %v133 = vpack.c.b16 %v119, %v118
    %v134 = vpack.c.b16 %v121, %v120
    %v135 = vpack.c.b16 %v123, %v122
    %v136 = vpack.c.b16 %v125, %v124
    %v137 = vpack.c.b16 %v127, %v126
    %v138 = vpack.c.b16 %v129, %v128
    %v139 = vpack.c.b16 %v131, %v130
    %148 = vmatprep.subr.bf16.mxu0 0
    %149 = vmatpush1.bf16.msra.mxu0 %v139
    %150 = vmatprep.subr.bf16.mxu0 0
    %151 = vmatpush1.bf16.msra.mxu0 %v138
    %152 = vmatprep.subr.bf16.mxu0 0
    %153 = vmatpush1.bf16.msra.mxu0 %v137
    %154 = vmatprep.subr.bf16.mxu0 0
    %155 = vmatpush1.bf16.msra.mxu0 %v136
    %156 = vmatprep.subr.bf16.mxu0 0
    %157 = vmatpush1.bf16.msra.mxu0 %v135
    %158 = vmatprep.subr.bf16.mxu0 0
    %159 = vmatpush1.bf16.msra.mxu0 %v134
    %160 = vmatprep.subr.bf16.mxu0 0
    %161 = vmatpush1.bf16.msra.mxu0 %v133
    %162 = vmatprep.subr.bf16.mxu0 0
    %163 = vmatpush1.bf16.msra.mxu0 %v132
    %164 = vmatprep.subr.bf16.mxu0 0
    %165 = vmatpush2.bf16.msra.mxu0 0
    %166 = vmatprep.subr.bf16.mxu0 0
    %167 = vmatpush2.bf16.msra.mxu0 0
    %168 = vmatprep.subr.bf16.mxu0 0
    %169 = vmatpush2.bf16.msra.mxu0 0
    %170 = vmatprep.subr.bf16.mxu0 0
    %171 = vmatpush2.bf16.msra.mxu0 0
    %172 = vmatprep.subr.bf16.mxu0 0
    %173 = vmatpush2.bf16.msra.mxu0 0
    %174 = vmatprep.subr.bf16.mxu0 0
    %175 = vmatpush2.bf16.msra.mxu0 0
    %176 = vmatprep.subr.bf16.mxu0 0
    %177 = vmatpush2.bf16.msra.mxu0 0
    %178 = vmatprep.subr.bf16.mxu0 0
    %179 = vmatpush2.bf16.msra.mxu0 0
    %180 = vmatprep.mubr.bf16.mxu0 0
    %181 = vmatmul.mubr.bf16.gmra.mxu0 %v98
    %v182 = vpop.f32.mrf.mxu0
    %v183 = vadd.f32 %v92, %v182
    %v184 = vpop.f32.mrf.mxu0
    %v185 = vpop.f32.mrf.mxu0
    %v186 = vadd.f32 %v92, %v185
    %v187 = vpop.f32.mrf.mxu0
    %188 = vdwg.mxu0
    %v189 = vmul.f32 %v183, 0.1
    %v190 = vmul.f32 %v186, 0.1
    %v191 = vmax.f32 %v183, %v189
    %v192 = vmax.f32 %v186, %v190
    %v193 = vld [vmem:[#allocation2] sm:$0xff]
    %v194 = vld [vmem:[#allocation2 + $0x8] sm:$0xff]
    %v195 = vpack.c.bf16 %v192, %v191
    %v196 = vld [vmem:[#allocation8] sm:$0xf]
    %v197 = vld [vmem:[#allocation8 + $0x4] sm:$0xf]
    %v198 = vld [vmem:[#allocation8 + $0x8] sm:$0xf]
    %v199 = vld [vmem:[#allocation8 + $0xc] sm:$0xf]
    %v200 = vld [vmem:[#allocation8 + $0x10] sm:$0xf]
    %v201 = vld [vmem:[#allocation8 + $0x14] sm:$0xf]
    %v202 = vld [vmem:[#allocation8 + $0x18] sm:$0xf]
    %v203 = vld [vmem:[#allocation8 + $0x1c] sm:$0xf]
    %v204 = vld [vmem:[#allocation8 + $0x20] sm:$0xf]
    %v205 = vld [vmem:[#allocation8 + $0x24] sm:$0xf]
    %v206 = vld [vmem:[#allocation8 + $0x28] sm:$0xf]
    %v207 = vld [vmem:[#allocation8 + $0x2c] sm:$0xf]
    %v208 = vld [vmem:[#allocation8 + $0x30] sm:$0xf]
    %v209 = vld [vmem:[#allocation8 + $0x34] sm:$0xf]
    %v210 = vld [vmem:[#allocation8 + $0x38] sm:$0xf]
    %v211 = vld [vmem:[#allocation8 + $0x3c] sm:$0xf]
    %v228 = vunpack.c.l.b16 %v196
    %v229 = vunpack.c.l.b16 %v197
    %v230 = vunpack.c.l.b16 %v198
    %v231 = vunpack.c.l.b16 %v199
    %v232 = vunpack.c.l.b16 %v200
    %v233 = vunpack.c.l.b16 %v201
    %v234 = vunpack.c.l.b16 %v202
    %v235 = vunpack.c.l.b16 %v203
    %v236 = vunpack.c.l.b16 %v204
    %v237 = vunpack.c.l.b16 %v205
    %v238 = vunpack.c.l.b16 %v206
    %v239 = vunpack.c.l.b16 %v207
    %v240 = vunpack.c.l.b16 %v208
    %v241 = vunpack.c.l.b16 %v209
    %v242 = vunpack.c.l.b16 %v210
    %v243 = vunpack.c.l.b16 %v211
    %v244 = vpack.c.b16 %v229, %v228
    %v245 = vpack.c.b16 %v231, %v230
    %v246 = vpack.c.b16 %v233, %v232
    %v247 = vpack.c.b16 %v235, %v234
    %v248 = vpack.c.b16 %v237, %v236
    %v249 = vpack.c.b16 %v239, %v238
    %v250 = vpack.c.b16 %v241, %v240
    %v251 = vpack.c.b16 %v243, %v242
    %260 = vmatprep.subr.bf16.mxu0 0
    %261 = vmatpush1.bf16.msra.mxu0 %v251
    %262 = vmatprep.subr.bf16.mxu0 0
    %263 = vmatpush1.bf16.msra.mxu0 %v250
    %264 = vmatprep.subr.bf16.mxu0 0
    %265 = vmatpush1.bf16.msra.mxu0 %v249
    %266 = vmatprep.subr.bf16.mxu0 0
    %267 = vmatpush1.bf16.msra.mxu0 %v248
    %268 = vmatprep.subr.bf16.mxu0 0
    %269 = vmatpush1.bf16.msra.mxu0 %v247
    %270 = vmatprep.subr.bf16.mxu0 0
    %271 = vmatpush1.bf16.msra.mxu0 %v246
    %272 = vmatprep.subr.bf16.mxu0 0
    %273 = vmatpush1.bf16.msra.mxu0 %v245
    %274 = vmatprep.subr.bf16.mxu0 0
    %275 = vmatpush1.bf16.msra.mxu0 %v244
    %276 = vmatprep.subr.bf16.mxu0 0
    %277 = vmatpush2.bf16.msra.mxu0 0
    %278 = vmatprep.subr.bf16.mxu0 0
    %279 = vmatpush2.bf16.msra.mxu0 0
    %280 = vmatprep.subr.bf16.mxu0 0
    %281 = vmatpush2.bf16.msra.mxu0 0
    %282 = vmatprep.subr.bf16.mxu0 0
    %283 = vmatpush2.bf16.msra.mxu0 0
    %284 = vmatprep.subr.bf16.mxu0 0
    %285 = vmatpush2.bf16.msra.mxu0 0
    %286 = vmatprep.subr.bf16.mxu0 0
    %287 = vmatpush2.bf16.msra.mxu0 0
    %288 = vmatprep.subr.bf16.mxu0 0
    %289 = vmatpush2.bf16.msra.mxu0 0
    %290 = vmatprep.subr.bf16.mxu0 0
    %291 = vmatpush2.bf16.msra.mxu0 0
    %292 = vmatprep.mubr.bf16.mxu0 0
    %293 = vmatmul.mubr.bf16.gmra.mxu0 %v195
    %v294 = vpop.f32.mrf.mxu0
    %v295 = vadd.f32 0.0, %v294
    %v296 = vpop.f32.mrf.mxu0
    %v297 = vpop.f32.mrf.mxu0
    %v298 = vadd.f32 0.0, %v297
    %v299 = vpop.f32.mrf.mxu0
    %300 = vdwg.mxu0
    %v301 = vadd.f32 %v193, %v295
    %v302 = vadd.f32 %v194, %v298
    %303 = vst [vmem:[#allocation2] sm:$0xff] %v301
    %304 = vst [vmem:[#allocation2 + $0x8] sm:$0xff] %v302
    // Predicated region
    $region38: #{tpu_custom_call.1} parent=1 // pred_check
      %p305 = pneg %p63
    $region39: #{tpu_custom_call.1} parent=1 // pred_check_branch
      %307 = sbr.rel (%p305) target = $region41
    $region40: #{tpu_custom_call.1} parent=1 // pred_region
      %v308 = vld [vmem:[#allocation2] sm:$0xff]
      %v309 = vld [vmem:[#allocation2 + $0x8] sm:$0xff]
      %v310 = vld [vmem:[%s4] sm:$0x1]
      %v312 = vlaneseq
      %v313 = vshrl.u32 %v312, 7
      %v314 = vsub.s32 0, %v313
      %v315 = vrot.slane %v310, %v314
      %v317 = vadd.f32 %v308, %v315
      %v318 = vadd.f32 %v309, %v315
      %319 = vst [vmem:[#allocation9] sm:$0xff] %v317
      %320 = vst [vmem:[#allocation9 + $0x8] sm:$0xff] %v318
    $region41: #{tpu_custom_call.1} parent=1 // pred_fallthru
      _
    // Predicated region
    $region42: #{tpu_custom_call.1} parent=1 // pred_check
      _
    $region43: #{tpu_custom_call.1} parent=1 // pred_check_branch
      %322 = sbr.rel (0) target = $region45
    $region44: #{tpu_custom_call.1} parent=1 // pred_region
      %s324 = ssub.s32 256, 256
      %325 = vsyncadd [#allocation5], %s324
      %s326 = sshll.u32 [#allocation9], 4
      %s327 = int_to_ptr.vmem [resolvable:$true] %s326
      %332 = dma.vmem_to_hbm [thread:$0]  %s327, 256, %s5, [#allocation5], 128, 128, 8
    $region45: #{tpu_custom_call.1} parent=1 // pred_fallthru
      _
    // Predicated region
    $region46: #{tpu_custom_call.1} parent=1 // pred_check
      _
    $region47: #{tpu_custom_call.1} parent=1 // pred_check_branch
      %334 = sbr.rel (0) target = $region49
    $region48: #{tpu_custom_call.1} parent=1 // pred_region
      %335 = dma.done [#allocation5], 256
    $region49: #{tpu_custom_call.1} parent=1 // pred_fallthru
      _
    %336 = vsyncpa [#allocation4], 1
    %337 = vsyncpa [#allocation7], 1
    %338 = vsyncpa [#allocation5], 1

</llo_original>
